<compile_context>
chip_gen: v7x
topology: tpu7x:2x2x1
jax: 0.10.0
libtpu: 0.0.40
codegen_flags: <defaults>
</compile_context>

<pallas_src>
import jax
import jax.numpy as jnp
from jax.experimental import pallas as pl
from jax.experimental.pallas import tpu as pltpu

OBS = 2               # forced by cat([state, part]) feeding Linear(2*obs_size, 4)
N_PARAMS = 16         # 11 real scalars after the W3@W2 fold, padded to 16 (64 B SMEM)
LANES = 128           # batch minor dim -> vreg lanes
MAX_ROWS_TILE = 2048  # rows (sublanes) per grid step: ~2 MiB in + ~1 MiB out per step
MIN_ROWS_TILE = 8     # (8,128) vreg granularity


def critic_kernel(p_ref, x_ref, o_ref):
    """p_ref: (16,) f32 SMEM.  x_ref: (OBS, ROWS, 128) VMEM.  o_ref: (ROWS, 128) VMEM.

    Param layout (after pack-time algebraic folds):
      [0:4]  W1 (2,2) row-major       [4:6]  b1 (2,)
      [6:8]  (W3 @ W2)[:, :2]   -> coefficients on state
      [8:10] (W3 @ W2)[:, 2:4]  -> coefficients on part
      [10]   W3 @ b2 + b3
    """
    s0 = x_ref[0]                       # (ROWS, 128) feature 0, batch in sublanes x lanes
    s1 = x_ref[1]                       # (ROWS, 128) feature 1

    # part_classifier: Linear(2, 2) + Sigmoid, with sigmoid(x) = 0.5*tanh(x/2) + 0.5
    # (one EUP push per activation, no divide).
    part0 = 0.5 * jnp.tanh(0.5 * (p_ref[0] * s0 + p_ref[1] * s1 + p_ref[4])) + 0.5
    part1 = 0.5 * jnp.tanh(0.5 * (p_ref[2] * s0 + p_ref[3] * s1 + p_ref[5])) + 0.5

    # critic: Linear(4,4) -> Linear(4,1) folded at pack time into one affine form on
    # cat([state, part]) (cat itself folded algebraically), then Tanh.
    o_ref[...] = jnp.tanh(p_ref[6] * s0 + p_ref[7] * s1
                          + p_ref[8] * part0 + p_ref[9] * part1 + p_ref[10])


def _round_up(x, m):
    return (x + m - 1) // m * m


def pack_critic_params(params):
    """Fold W3@W2 / W3@b2+b3 and pack everything into one (16,) f32 SMEM vector.

    Call ONCE per model (hoisted out of the per-call path)."""
    W1, b1, W2, b2, W3, b3 = (jnp.asarray(p, jnp.float32) for p in params)
    assert W1.shape == (2, OBS) and b1.shape == (2,)
    assert W2.shape == (4, 2 * OBS) and b2.shape == (4,)
    assert W3.shape == (1, 4) and b3.shape == (1,)
    c = (W3 @ W2).reshape(-1)            # (4,): tanh(W3@(W2@x+b2)+b3) == tanh(c@x + c_b)
    c_b = (W3 @ b2 + b3).reshape(-1)     # (1,)
    flat = jnp.concatenate([W1.reshape(-1), b1, c, c_b])   # 11 scalars
    return jnp.zeros((N_PARAMS,), jnp.float32).at[:flat.shape[0]].set(flat)


@jax.jit
def _critic_forward_impl(states, packed_params):
    """states: (B, OBS) f32  ->  (B, 1) f32.  Layout prep + kernel under one jit."""
    B = states.shape[0]
    rows = max(pl.cdiv(B, LANES), 1)
    rows_tile = min(MAX_ROWS_TILE, max(MIN_ROWS_TILE, _round_up(rows, MIN_ROWS_TILE)))
    rows_pad = _round_up(rows, rows_tile)
    b_pad = rows_pad * LANES

    # Feature-major, batch split across (sublane rows x 128 lanes).  Padded slots are
    # zeros; their sigmoid/tanh results are discarded.  Kept inside this jit so the
    # pad/transpose fuses with the dispatch (no separate HBM pass).
    x = jnp.zeros((b_pad, OBS), jnp.float32).at[:B].set(states.astype(jnp.float32))
    x_t = x.T.reshape(OBS, rows_pad, LANES)

    out = pl.pallas_call(
        critic_kernel,
        grid=(rows_pad // rows_tile,),
        out_shape=jax.ShapeDtypeStruct((rows_pad, LANES), jnp.float32),
        in_specs=[
            pl.BlockSpec(memory_space=pltpu.MemorySpace.SMEM),          # packed params
            pl.BlockSpec((OBS, rows_tile, LANES), lambda i: (0, i, 0)),  # state slab
        ],
        out_specs=pl.BlockSpec((rows_tile, LANES), lambda i: (i, 0)),
        compiler_params=pltpu.CompilerParams(
            dimension_semantics=("parallel",)),   # shard grid steps across v7x's 2 TCs
    )(packed_params, x_t)

    return out.reshape(b_pad)[:B].reshape(B, 1)


def critic_forward_batch_pallas(states, packed_params):
    """Batched forward: states (B, OBS) -> (B, 1); row b == CriticNN.forward(states[b])."""
    return _critic_forward_impl(jnp.asarray(states, jnp.float32), packed_params)


def critic_forward_pallas(state, packed_params):
    """Unbatched forward matching PyTorch exactly: state (OBS,) -> (1,)."""
    return critic_forward_batch_pallas(jnp.reshape(state, (1, OBS)), packed_params)[0]


def critic_forward_ref(state, params):
    """Pure-JAX reference of the exact PyTorch forward (explicit concat, no folds)."""
    W1, b1, W2, b2, W3, b3 = params
    part = jax.nn.sigmoid(W1 @ state + b1)
    x = jnp.concatenate([state, part])
    h = W2 @ x + b2
    return jnp.tanh(W3 @ h + b3)


if __name__ == "__main__":
    # obs_size is forced to 2 by the forward's cat / Linear(2*obs_size) shape constraint.
    obs_size = OBS
    key = jax.random.PRNGKey(0)
    ks = jax.random.split(key, 9)

    def unif(k, shape, fan_in):
        bound = 1.0 / jnp.sqrt(float(fan_in))
        return jax.random.uniform(k, shape, jnp.float32, -bound, bound)

    W1 = unif(ks[0], (2, obs_size), obs_size)          # part_classifier Linear
    b1 = unif(ks[1], (2,), obs_size)
    W2 = unif(ks[2], (4, 2 * obs_size), 2 * obs_size)  # critic Linear 1
    b2 = unif(ks[3], (4,), 2 * obs_size)
    W3 = unif(ks[4], (1, 4), 4)                        # critic Linear 2
    b3 = unif(ks[5], (1,), 4)
    params = (W1, b1, W2, b2, W3, b3)

    # Pack + fold parameters ONCE (hoisted out of the per-call path).
    packed = jax.block_until_ready(pack_critic_params(params))

    # --- unbatched forward (exact PyTorch semantics) ---
    state = jax.random.normal(ks[6], (obs_size,), jnp.float32)
    out = jax.block_until_ready(critic_forward_pallas(state, packed))
    ref = jax.block_until_ready(critic_forward_ref(state, params))
    assert out.shape == (1,), out.shape
    assert jnp.allclose(out, ref, rtol=1e-5, atol=1e-5), (out, ref)

    # --- small batched forward ---
    B = 8
    states = jax.random.normal(ks[7], (B, obs_size), jnp.float32)
    out_b = jax.block_until_ready(critic_forward_batch_pallas(states, packed))
    ref_b = jax.vmap(lambda s: critic_forward_ref(s, params))(states)
    assert out_b.shape == (B, 1), out_b.shape
    assert jnp.allclose(out_b, ref_b, rtol=1e-5, atol=1e-5), (out_b, ref_b)

    # --- batch spanning >1 lane row (exercises the (rows, 128) sublane layout) ---
    B2 = 300
    states2 = jax.random.normal(ks[8], (B2, obs_size), jnp.float32)
    out_b2 = jax.block_until_ready(critic_forward_batch_pallas(states2, packed))
    ref_b2 = jax.vmap(lambda s: critic_forward_ref(s, params))(states2)
    assert out_b2.shape == (B2, 1), out_b2.shape
    assert jnp.allclose(out_b2, ref_b2, rtol=1e-5, atol=1e-5)

    print("KERNEL_OK")
</pallas_src>

<mosaic_0001>
module attributes {stable_mosaic.version = 11 : i64} {
  func.func @critic_kernel(%arg0: i32, %arg1: memref<16xf32, #tpu.memory_space<smem>>, %arg2: memref<2x8x128xf32, #tpu.memory_space<vmem>>, %arg3: memref<8x128xf32, #tpu.memory_space<vmem>>) attributes {dimension_semantics = [#tpu.dimension_semantics<parallel>], iteration_bounds = array<i64: 1>, scalar_prefetch = 0 : i64, scratch_operands = 0 : i64, tpu.core_type = #tpu.core_type<tc>, window_params = [{transform_indices = @transform_0, window_bounds = array<i64: 16>}, {transform_indices = @transform_1, window_bounds = array<i64: 2, 8, 128>}, {transform_indices = @transform_2, window_bounds = array<i64: 8, 128>}]} {
    %c0 = arith.constant 0 : index
    %c0_0 = arith.constant 0 : index
    %c0_1 = arith.constant 0 : index
    %0 = vector.load %arg2[%c0, %c0_0, %c0_1] : memref<2x8x128xf32, #tpu.memory_space<vmem>>, vector<1x8x128xf32>
    %1 = vector.shape_cast %0 : vector<1x8x128xf32> to vector<8x128xf32>
    %c1 = arith.constant 1 : index
    %c0_2 = arith.constant 0 : index
    %c0_3 = arith.constant 0 : index
    %2 = vector.load %arg2[%c1, %c0_2, %c0_3] : memref<2x8x128xf32, #tpu.memory_space<vmem>>, vector<1x8x128xf32>
    %3 = vector.shape_cast %2 : vector<1x8x128xf32> to vector<8x128xf32>
    %c0_4 = arith.constant 0 : index
    %4 = memref.load %arg1[%c0_4] : memref<16xf32, #tpu.memory_space<smem>>
    %5 = vector.broadcast %4 : f32 to vector<8x128xf32>
    %6 = arith.mulf %5, %1 : vector<8x128xf32>
    %c1_5 = arith.constant 1 : index
    %7 = memref.load %arg1[%c1_5] : memref<16xf32, #tpu.memory_space<smem>>
    %8 = vector.broadcast %7 : f32 to vector<8x128xf32>
    %9 = arith.mulf %8, %3 : vector<8x128xf32>
    %10 = arith.addf %6, %9 : vector<8x128xf32>
    %c4 = arith.constant 4 : index
    %11 = memref.load %arg1[%c4] : memref<16xf32, #tpu.memory_space<smem>>
    %12 = vector.broadcast %11 : f32 to vector<8x128xf32>
    %13 = arith.addf %10, %12 : vector<8x128xf32>
    %cst = arith.constant 5.000000e-01 : f32
    %14 = vector.broadcast %cst : f32 to vector<8x128xf32>
    %15 = arith.mulf %14, %13 : vector<8x128xf32>
    %16 = math.tanh %15 : vector<8x128xf32>
    %cst_6 = arith.constant 5.000000e-01 : f32
    %17 = vector.broadcast %cst_6 : f32 to vector<8x128xf32>
    %18 = arith.mulf %17, %16 : vector<8x128xf32>
    %cst_7 = arith.constant 5.000000e-01 : f32
    %19 = vector.broadcast %cst_7 : f32 to vector<8x128xf32>
    %20 = arith.addf %18, %19 : vector<8x128xf32>
    %c2 = arith.constant 2 : index
    %21 = memref.load %arg1[%c2] : memref<16xf32, #tpu.memory_space<smem>>
    %22 = vector.broadcast %21 : f32 to vector<8x128xf32>
    %23 = arith.mulf %22, %1 : vector<8x128xf32>
    %c3 = arith.constant 3 : index
    %24 = memref.load %arg1[%c3] : memref<16xf32, #tpu.memory_space<smem>>
    %25 = vector.broadcast %24 : f32 to vector<8x128xf32>
    %26 = arith.mulf %25, %3 : vector<8x128xf32>
    %27 = arith.addf %23, %26 : vector<8x128xf32>
    %c5 = arith.constant 5 : index
    %28 = memref.load %arg1[%c5] : memref<16xf32, #tpu.memory_space<smem>>
    %29 = vector.broadcast %28 : f32 to vector<8x128xf32>
    %30 = arith.addf %27, %29 : vector<8x128xf32>
    %cst_8 = arith.constant 5.000000e-01 : f32
    %31 = vector.broadcast %cst_8 : f32 to vector<8x128xf32>
    %32 = arith.mulf %31, %30 : vector<8x128xf32>
    %33 = math.tanh %32 : vector<8x128xf32>
    %cst_9 = arith.constant 5.000000e-01 : f32
    %34 = vector.broadcast %cst_9 : f32 to vector<8x128xf32>
    %35 = arith.mulf %34, %33 : vector<8x128xf32>
    %cst_10 = arith.constant 5.000000e-01 : f32
    %36 = vector.broadcast %cst_10 : f32 to vector<8x128xf32>
    %37 = arith.addf %35, %36 : vector<8x128xf32>
    %c6 = arith.constant 6 : index
    %38 = memref.load %arg1[%c6] : memref<16xf32, #tpu.memory_space<smem>>
    %39 = vector.broadcast %38 : f32 to vector<8x128xf32>
    %40 = arith.mulf %39, %1 : vector<8x128xf32>
    %c7 = arith.constant 7 : index
    %41 = memref.load %arg1[%c7] : memref<16xf32, #tpu.memory_space<smem>>
    %42 = vector.broadcast %41 : f32 to vector<8x128xf32>
    %43 = arith.mulf %42, %3 : vector<8x128xf32>
    %44 = arith.addf %40, %43 : vector<8x128xf32>
    %c8 = arith.constant 8 : index
    %45 = memref.load %arg1[%c8] : memref<16xf32, #tpu.memory_space<smem>>
    %46 = vector.broadcast %45 : f32 to vector<8x128xf32>
    %47 = arith.mulf %46, %20 : vector<8x128xf32>
    %48 = arith.addf %44, %47 : vector<8x128xf32>
    %c9 = arith.constant 9 : index
    %49 = memref.load %arg1[%c9] : memref<16xf32, #tpu.memory_space<smem>>
    %50 = vector.broadcast %49 : f32 to vector<8x128xf32>
    %51 = arith.mulf %50, %37 : vector<8x128xf32>
    %52 = arith.addf %48, %51 : vector<8x128xf32>
    %c10 = arith.constant 10 : index
    %53 = memref.load %arg1[%c10] : memref<16xf32, #tpu.memory_space<smem>>
    %54 = vector.broadcast %53 : f32 to vector<8x128xf32>
    %55 = arith.addf %52, %54 : vector<8x128xf32>
    %56 = math.tanh %55 : vector<8x128xf32>
    %c0_11 = arith.constant 0 : index
    %c0_12 = arith.constant 0 : index
    %57 = vector.load %arg3[%c0_11, %c0_12] : memref<8x128xf32, #tpu.memory_space<vmem>>, vector<8x128xf32>
    tpu.vector_store %arg3[%c0_11, %c0_12], %56 {strides = array<i32>} : memref<8x128xf32, #tpu.memory_space<vmem>>, vector<8x128xf32>,
    return
  }
  func.func @transform_0(%arg0: i32) -> i32 {
    %c0_i32 = arith.constant 0 : i32
    %c0_i32_0 = arith.constant 0 : i32
    return %c0_i32 : i32
  }
  func.func @transform_1(%arg0: i32) -> (i32, i32, i32) {
    %c0_i32 = arith.constant 0 : i32
    %c0_i32_0 = arith.constant 0 : i32
    %c0_i32_1 = arith.constant 0 : i32
    return %c0_i32, %arg0, %c0_i32_0 : i32, i32, i32
  }
  func.func @transform_2(%arg0: i32) -> (i32, i32) {
    %c0_i32 = arith.constant 0 : i32
    %c0_i32_0 = arith.constant 0 : i32
    return %arg0, %c0_i32 : i32, i32
  }
}

</mosaic_0001>

<llo_original>
// kernel: _critic_forward_impl.1
$region0: #{_critic_forward_impl.1}
  #allocation0 [shape = 'u32[]', space=smem, size = 0x4, offset = 0x4, fixed_abs, tag = 'smem constant byte address 0x4 - core index']
  #allocation1 [shape = 'u32[144,128]{1,0:T(1,128)}', space=vmem, size = 0x12000, scoped, tag = 'internal scratch']
  %s0 = inlined_call_operand.vmem [shape: f32[16], index: 0, kind: input, shape index: {}]
  %s1 = inlined_call_operand.vmem [shape: f32[2,8,128], index: 1, kind: input, shape index: {}]
  %s2 = inlined_call_operand.vmem [shape: f32[8,128], index: 2, kind: output, shape index: {}]
  %s3 = sld [smem:[#allocation0]]
  $region22: #{_critic_forward_impl.1} parent=0
    _
  %s5 = ssub.s32 1, %s3
  %s6 = scalar_select 0, %s5, %s3
  $region1: #{_critic_forward_impl.1} parent=0
    #allocation2 [shape = 'u8[512]{0}', space=smem, size = 0x200, scoped, tag = 'input window, operand 0, single buffered']
    #allocation3 [shape = 's32[1]{0}', space=sflag, size = 0x4, scoped, tag = 'scoped memory for _critic_forward_impl.1']
    %7 = vsyncpa [#allocation3], 0
    // Predicated region
    $region2: #{_critic_forward_impl.1} parent=1 // pred_check
      _
    $region3: #{_critic_forward_impl.1} parent=1 // pred_check_branch
      %9 = sbr.rel (0) target = $region5
    $region4: #{_critic_forward_impl.1} parent=1 // pred_region
      %s11 = ssub.s32 16, 16
      %12 = vsyncadd [#allocation3], %s11
      %s14 = sshll.u32 %s0, 4
      %s15 = int_to_ptr.vmem [resolvable:$true] %s14
      %17 = dma.vmem_to_smem %s15, 16, [#allocation2], [#allocation3]
    $region5: #{_critic_forward_impl.1} parent=1 // pred_fallthru
      _
    // Predicated region
    $region6: #{_critic_forward_impl.1} parent=1 // pred_check
      _
    $region7: #{_critic_forward_impl.1} parent=1 // pred_check_branch
      %19 = sbr.rel (0) target = $region9
    $region8: #{_critic_forward_impl.1} parent=1 // pred_region
      _
    $region9: #{_critic_forward_impl.1} parent=1 // pred_fallthru
      _
    // Predicated region
    $region10: #{_critic_forward_impl.1} parent=1 // pred_check
      _
    $region11: #{_critic_forward_impl.1} parent=1 // pred_check_branch
      %21 = sbr.rel (0) target = $region13
    $region12: #{_critic_forward_impl.1} parent=1 // pred_region
      %22 = dma.done [#allocation3], 16
    $region13: #{_critic_forward_impl.1} parent=1 // pred_fallthru
      _
    %23 = sfence
    %v24 = vld [vmem:[%s1] sm:$0xff]
    %s25 = scalar_lea.vmem %s1, 8
    %v26 = vld [vmem:[%s25] sm:$0xff]
    %s27 = sld [smem:[#allocation2]]
    %v28 = vstv %s27
    %v29 = vmul.f32 %v28, %v24
    %s30 = sld [smem:[#allocation2 + $0x1]]
    %v31 = vstv %s30
    %v32 = vmul.f32 %v31, %v26
    %v33 = vadd.f32 %v29, %v32
    %s34 = sld [smem:[#allocation2 + $0x4]]
    %v35 = vstv %s34
    %v36 = vadd.f32 %v33, %v35
    %v37 = vmul.f32 %v36, 0.5
    %v38 = vtanh.pop %v37
    %v39 = vmul.f32 %v38, 0.5
    %v40 = vadd.f32 %v39, 0.5
    %s41 = sld [smem:[#allocation2 + $0x2]]
    %v42 = vstv %s41
    %v43 = vmul.f32 %v42, %v24
    %s44 = sld [smem:[#allocation2 + $0x3]]
    %v45 = vstv %s44
    %v46 = vmul.f32 %v45, %v26
    %v47 = vadd.f32 %v43, %v46
    %s48 = sld [smem:[#allocation2 + $0x5]]
    %v49 = vstv %s48
    %v50 = vadd.f32 %v47, %v49
    %v51 = vmul.f32 %v50, 0.5
    %v52 = vtanh.pop %v51
    %v53 = vmul.f32 %v52, 0.5
    %v54 = vadd.f32 %v53, 0.5
    %s55 = sld [smem:[#allocation2 + $0x6]]
    %v56 = vstv %s55
    %v57 = vmul.f32 %v56, %v24
    %s58 = sld [smem:[#allocation2 + $0x7]]
    %v59 = vstv %s58
    %v60 = vmul.f32 %v59, %v26
    %v61 = vadd.f32 %v57, %v60
    %s62 = sld [smem:[#allocation2 + $0x8]]
    %v63 = vstv %s62
    %v64 = vmul.f32 %v63, %v40
    %v65 = vadd.f32 %v61, %v64
    %s66 = sld [smem:[#allocation2 + $0x9]]
    %v67 = vstv %s66
    %v68 = vmul.f32 %v67, %v54
    %v69 = vadd.f32 %v65, %v68
    %s70 = sld [smem:[#allocation2 + $0xa]]
    %v71 = vstv %s70
    %v72 = vadd.f32 %v69, %v71
    %v73 = vtanh.pop %v72
    %74 = vst [vmem:[%s2] sm:$0xff] %v73
    // Predicated region
    $region14: #{_critic_forward_impl.1} parent=1 // pred_check
      _
    $region15: #{_critic_forward_impl.1} parent=1 // pred_check_branch
      %76 = sbr.rel (0) target = $region17
    $region16: #{_critic_forward_impl.1} parent=1 // pred_region
      _
    $region17: #{_critic_forward_impl.1} parent=1 // pred_fallthru
      _
    // Predicated region
    $region18: #{_critic_forward_impl.1} parent=1 // pred_check
      _
    $region19: #{_critic_forward_impl.1} parent=1 // pred_check_branch
      %78 = sbr.rel (0) target = $region21
    $region20: #{_critic_forward_impl.1} parent=1 // pred_region
      _
    $region21: #{_critic_forward_impl.1} parent=1 // pred_fallthru
      _
    %79 = vsyncpa [#allocation3], 1

</llo_original>
